<compile_context>
chip_gen: v7x
topology: tpu7x:2x2x1
jax: 0.10.0
libtpu: 0.0.40
codegen_flags: <defaults>
</compile_context>

<pallas_src>
import jax
import jax.numpy as jnp
from jax.experimental import pallas as pl
from jax.experimental.pallas import tpu as pltpu

HIDDEN = 512
EPS = 1e-5
LANE = 128
SUBLANE = 8
TK = 2048          # K tile used only when W1 cannot stay fully resident


def _round_up(x, m):
    return (x + m - 1) // m * m


# ----------------------------------------------------------------------------
# Device / VMEM budgeting (generation-aware)
# ----------------------------------------------------------------------------
def _vmem_capacity_bytes():
    try:
        return int(pltpu.get_tpu_info().vmem_capacity_bytes)
    except Exception:
        return 64 * 1024 * 1024        # conservative fallback (v7x per-TC size)


def _budgets():
    cap = _vmem_capacity_bytes()
    if cap <= 64 * 1024 * 1024:        # v7x: 64 MiB per TensorCore
        return 40 * 1024 * 1024, 48 * 1024 * 1024      # (tile budget, vmem limit)
    return 80 * 1024 * 1024, 96 * 1024 * 1024          # v5e/v6e: 128 MiB physical


def _is_multi_tc_chip():
    # Only megacore / dual-TC parts benefit from forcing >=2 "parallel" batch
    # tiles; on single-TC v5e/v6e the grid is a serial loop and a split just
    # adds per-step overhead + W1 re-streaming.
    try:
        kind = jax.devices()[0].device_kind.lower()
    except Exception:
        return False
    return any(t in kind for t in ("v4", "v5p", "v7", "7x"))


def _vmem_bytes(tb, tk, k_tiles, out_pad):
    bf16, f32 = 2, 4
    x_b = 2 * tb * tk * f32                              # f32 x tile, double-buffered
    w1_b = 2 * tk * HIDDEN * bf16                        # double-buffered (resident or per-k)
    w2_b = 2 * HIDDEN * out_pad * bf16
    bias_b = 2 * SUBLANE * (HIDDEN + out_pad) * f32      # (1, .) blocks pad to (8, .)
    acc_b = tb * HIDDEN * f32                            # scratch accumulator
    out_b = 2 * tb * out_pad * f32                       # double-buffered out tile
    # Epilogue temporaries: h (f32) + h (bf16) + pre-store f32 out tile.
    epi_b = tb * HIDDEN * (f32 + bf16) + tb * out_pad * f32
    return x_b + w1_b + w2_b + bias_b + acc_b + out_b + epi_b


def _pick_tb(B, tk, k_tiles, out_pad, tile_budget, force_split):
    b_eff = _round_up(B, SUBLANE)
    cap = min(b_eff, 1024)
    if force_split and b_eff > SUBLANE:
        cap = min(cap, _round_up(-(-b_eff // 2), SUBLANE))   # >= 2 batch tiles
    tb = cap
    while tb > SUBLANE and _vmem_bytes(tb, tk, k_tiles, out_pad) > tile_budget:
        tb -= SUBLANE
    return max(tb, SUBLANE)


# ----------------------------------------------------------------------------
# Kernel
# ----------------------------------------------------------------------------
def head_kernel(x_ref, w1_ref, b1_ref, w2_ref, b2_ref, out_ref, acc_ref):
    """Grid = (batch tiles, K tiles).

    The f32 x tile is cast to bf16 on-chip right before the first MXU pass.
    The f32 accumulator is seeded with the folded bias at k==0, K-accumulated,
    and on the last K step ReLU + the second matmul + bias produce the
    (lane-padded) output tile.  Dropout is identity; both BNs are folded.
    """
    k = pl.program_id(1)

    @pl.when(k == 0)
    def _():
        acc_ref[...] = jnp.broadcast_to(b1_ref[...], acc_ref.shape)

    # MXU pass 1: bf16 operands, f32 accumulation.
    acc_ref[...] += jnp.dot(x_ref[...].astype(jnp.bfloat16), w1_ref[...],
                            preferred_element_type=jnp.float32)

    @pl.when(k == pl.num_programs(1) - 1)
    def _():
        h = jnp.maximum(acc_ref[...], 0.0)                        # ReLU (bias already in acc)
        out = jnp.dot(h.astype(w2_ref.dtype), w2_ref[...],        # MXU pass 2 (bf16)
                      preferred_element_type=jnp.float32) + b2_ref[...]
        out_ref[...] = out.astype(out_ref.dtype)


# ----------------------------------------------------------------------------
# Parameter folding (run once, outside the hot path)
# ----------------------------------------------------------------------------
def fold_head_params(params):
    """Fold eval-mode BatchNorms into the adjacent Linears; prepare bf16,
    lane-padded (and, if K-tiled, K-padded) weights for the kernel."""
    in_f = params["w1"].shape[0]
    out_f = params["w2"].shape[1]
    out_pad = _round_up(out_f, LANE)
    tile_budget, _ = _budgets()

    s1 = params["bn1_gamma"] / jnp.sqrt(params["bn1_var"] + EPS)
    t1 = params["bn1_beta"] - params["bn1_mean"] * s1
    s2 = params["bn2_gamma"] / jnp.sqrt(params["bn2_var"] + EPS)
    t2 = params["bn2_beta"] - params["bn2_mean"] * s2

    # (x*s1 + t1) @ W1 + b1  ==  x @ (s1[:,None]*W1) + (t1 @ W1 + b1)
    w1 = params["w1"] * s1[:, None]
    b1 = t1 @ params["w1"] + params["b1"]
    # (h*s2 + t2) @ W2 + b2  ==  h @ (s2[:,None]*W2) + (t2 @ W2 + b2)
    w2 = params["w2"] * s2[:, None]
    b2 = t2 @ params["w2"] + params["b2"]

    # K-tiling decision: keep W1 fully resident (k_tiles == 1, no re-streaming)
    # whenever its double-buffered bf16 slab fits comfortably; otherwise
    # zero-pad in_f up to a multiple of TK (exact for a matmul) and K-tile.
    if 2 * in_f * HIDDEN * 2 <= tile_budget // 2:
        tk, in_pad = in_f, in_f
    else:
        tk = TK
        in_pad = _round_up(in_f, tk)
        w1 = jnp.pad(w1, ((0, in_pad - in_f), (0, 0)))

    # Pad N up to a 128-lane multiple: full-width MXU pass + unmasked stores.
    w2 = jnp.pad(w2, ((0, 0), (0, out_pad - out_f)))
    b2 = jnp.pad(b2, ((0, out_pad - out_f),))

    return {
        "w1": w1.astype(jnp.bfloat16),
        "b1": b1.reshape(1, HIDDEN).astype(jnp.float32),
        "w2": w2.astype(jnp.bfloat16),
        "b2": b2.reshape(1, out_pad).astype(jnp.float32),
        "in_f": in_f, "in_pad": in_pad, "tk": tk,
        "out_f": out_f, "out_pad": out_pad,
    }


# ----------------------------------------------------------------------------
# Wrapper
# ----------------------------------------------------------------------------
def head_forward(x_flat, folded, *, tb=None):
    B, in_f = x_flat.shape
    assert in_f == folded["in_f"]
    in_pad, tk = folded["in_pad"], folded["tk"]
    out_f, out_pad = folded["out_f"], folded["out_pad"]
    k_tiles = in_pad // tk

    tile_budget, limit_cap = _budgets()
    if tb is None:
        tb = _pick_tb(B, tk, k_tiles, out_pad, tile_budget, _is_multi_tc_chip())
    B_pad = _round_up(B, tb)
    grid = (B_pad // tb, k_tiles)

    # Zero-pad batch (whole tiles only) and, if K-tiled, the flatten dim.
    x = x_flat.astype(jnp.float32)
    if B_pad != B or in_pad != in_f:
        x = jnp.pad(x, ((0, B_pad - B), (0, in_pad - in_f)))

    if k_tiles == 1:
        w1_map = lambda i, k: (0, 0)       # fully resident: DMA'd once
    else:
        w1_map = lambda i, k: (k, 0)

    flops = 2 * B_pad * (in_pad * HIDDEN + HIDDEN * out_pad)
    bytes_accessed = (x.size * 4 + folded["w1"].size * 2 + folded["w2"].size * 2
                      + (HIDDEN + out_pad) * 4 + B_pad * out_pad * 4)

    vmem_est = _vmem_bytes(tb, tk, k_tiles, out_pad)
    vmem_limit = int(min(max(int(1.5 * vmem_est), 32 * 1024 * 1024), limit_cap))

    out = pl.pallas_call(
        head_kernel,
        out_shape=jax.ShapeDtypeStruct((B_pad, out_pad), jnp.float32),
        grid_spec=pltpu.PrefetchScalarGridSpec(
            num_scalar_prefetch=0,
            grid=grid,
            in_specs=[
                pl.BlockSpec((tb, tk), lambda i, k: (i, k)),            # x (f32, cast in-kernel)
                pl.BlockSpec((tk, HIDDEN), w1_map),                     # W1 (BN1 folded, bf16)
                pl.BlockSpec((1, HIDDEN), lambda i, k: (0, 0)),         # b1 (folded)
                pl.BlockSpec((HIDDEN, out_pad), lambda i, k: (0, 0)),   # W2 (BN2 folded, bf16)
                pl.BlockSpec((1, out_pad), lambda i, k: (0, 0)),        # b2 (folded, padded)
            ],
            out_specs=pl.BlockSpec((tb, out_pad), lambda i, k: (i, 0)),
            scratch_shapes=[pltpu.VMEM((tb, HIDDEN), jnp.float32)],
        ),
        compiler_params=pltpu.CompilerParams(
            dimension_semantics=("parallel", "arbitrary"),
            vmem_limit_bytes=vmem_limit,
        ),
        cost_estimate=pl.CostEstimate(flops=flops, transcendentals=0,
                                      bytes_accessed=bytes_accessed),
    )(x, folded["w1"], folded["b1"], folded["w2"], folded["b2"])

    return out[:B, :out_f]


# ----------------------------------------------------------------------------
# References
# ----------------------------------------------------------------------------
def head_reference(x_flat, params):
    s1 = params["bn1_gamma"] / jnp.sqrt(params["bn1_var"] + EPS)
    t1 = params["bn1_beta"] - params["bn1_mean"] * s1
    s2 = params["bn2_gamma"] / jnp.sqrt(params["bn2_var"] + EPS)
    t2 = params["bn2_beta"] - params["bn2_mean"] * s2
    xn = x_flat * s1 + t1
    h = jnp.maximum(xn @ params["w1"] + params["b1"], 0.0)
    hn = h * s2 + t2
    return hn @ params["w2"] + params["b2"]


def head_reference_folded_bf16(x_flat, folded):
    """Same numerics as the kernel (bf16 operands, f32 accumulation) in plain XLA."""
    xb = x_flat.astype(jnp.bfloat16)
    w1 = folded["w1"][:x_flat.shape[1], :]            # drop K zero-padding if any
    h = jnp.maximum(
        jnp.dot(xb, w1, preferred_element_type=jnp.float32) + folded["b1"], 0.0)
    out = jnp.dot(h.astype(jnp.bfloat16), folded["w2"],
                  preferred_element_type=jnp.float32) + folded["b2"]
    return out[:, :folded["out_f"]]


def init_params(key, in_f, out_f):
    ks = jax.random.split(key, 8)
    return {
        # Linear weights stored as (in, out) = transpose of torch's (out, in)
        "w1": jax.random.normal(ks[0], (in_f, HIDDEN), jnp.float32) * 0.02,
        "b1": jax.random.normal(ks[1], (HIDDEN,), jnp.float32) * 0.01,
        "w2": jax.random.normal(ks[2], (HIDDEN, out_f), jnp.float32) * 0.02,
        "b2": jax.random.normal(ks[3], (out_f,), jnp.float32) * 0.01,
        "bn1_gamma": 1.0 + 0.1 * jax.random.normal(ks[4], (in_f,), jnp.float32),
        "bn1_beta": 0.1 * jax.random.normal(ks[5], (in_f,), jnp.float32),
        "bn1_mean": 0.05 * jax.random.normal(ks[6], (in_f,), jnp.float32),
        "bn1_var": jnp.abs(1.0 + 0.1 * jax.random.normal(ks[7], (in_f,), jnp.float32)),
        "bn2_gamma": jnp.ones((HIDDEN,), jnp.float32),
        "bn2_beta": jnp.zeros((HIDDEN,), jnp.float32),
        "bn2_mean": jnp.zeros((HIDDEN,), jnp.float32),
        "bn2_var": jnp.ones((HIDDEN,), jnp.float32),
    }


if __name__ == "__main__":
    key = jax.random.PRNGKey(0)
    k_x, k_p = jax.random.split(key)

    B, C, H, W = 16, 4, 8, 8          # NCHW features into the Head (post-backbone)
    in_f = C * H * W                  # 256
    out_f = 16

    x_nchw = jax.random.normal(k_x, (B, C, H, W), jnp.float32)
    x_flat = x_nchw.reshape(B, -1)    # nn.Flatten()

    params = init_params(k_p, in_f, out_f)
    folded = fold_head_params(params)  # BN fold + bf16/pad prep, once

    out = head_forward(x_flat, folded)
    out = jax.block_until_ready(out)
    assert out.shape == (B, out_f)

    # Kernel vs an XLA emulation of the same bf16/f32 numerics: tight check.
    ref_bf16 = head_reference_folded_bf16(x_flat, folded)
    assert jnp.allclose(out, ref_bf16, atol=2e-3, rtol=2e-3), "mismatch vs bf16 reference"

    # Kernel vs full-f32 PyTorch-equivalent math: bf16-weight tolerance.
    ref_f32 = head_reference(x_flat, params)
    assert jnp.allclose(out, ref_f32, atol=1e-2, rtol=2e-2), "mismatch vs f32 reference"

    print("KERNEL_OK")
</pallas_src>

<mosaic_0001>
module attributes {stable_mosaic.version = 11 : i64} {
  func.func @head_kernel(%arg0: i32, %arg1: i32, %arg2: memref<16x256xf32, #tpu.memory_space<vmem>>, %arg3: memref<256x512xbf16, #tpu.memory_space<vmem>>, %arg4: memref<1x512xf32, #tpu.memory_space<vmem>>, %arg5: memref<512x128xbf16, #tpu.memory_space<vmem>>, %arg6: memref<1x128xf32, #tpu.memory_space<vmem>>, %arg7: memref<16x128xf32, #tpu.memory_space<vmem>>, %arg8: memref<16x512xf32, #tpu.memory_space<vmem>>) attributes {dimension_semantics = [#tpu.dimension_semantics<parallel>, #tpu.dimension_semantics<arbitrary>], iteration_bounds = array<i64: 1, 1>, scalar_prefetch = 0 : i64, scratch_operands = 1 : i64, tpu.core_type = #tpu.core_type<tc>, window_params = [{transform_indices = @transform_0, window_bounds = array<i64: 16, 256>}, {pipeline_mode = #tpu.pipeline_mode<synchronous>, transform_indices = @transform_1, window_bounds = array<i64: 256, 512>}, {pipeline_mode = #tpu.pipeline_mode<synchronous>, transform_indices = @transform_2, window_bounds = array<i64: 1, 512>}, {pipeline_mode = #tpu.pipeline_mode<synchronous>, transform_indices = @transform_3, window_bounds = array<i64: 512, 128>}, {pipeline_mode = #tpu.pipeline_mode<synchronous>, transform_indices = @transform_4, window_bounds = array<i64: 1, 128>}, {transform_indices = @transform_5, window_bounds = array<i64: 16, 128>}]} {
    %c0_i32 = arith.constant 0 : i32
    %0 = arith.cmpi eq, %arg1, %c0_i32 : i32
    %1 = arith.extui %0 : i1 to i32
    %c0_i32_0 = arith.constant 0 : i32
    %2 = arith.cmpi ne, %1, %c0_i32_0 : i32
    scf.if %2 {
      %c0_10 = arith.constant 0 : index
      %c0_11 = arith.constant 0 : index
      %13 = vector.load %arg4[%c0_10, %c0_11] : memref<1x512xf32, #tpu.memory_space<vmem>>, vector<1x512xf32>
      %14 = vector.shape_cast %13 : vector<1x512xf32> to vector<1x512xf32>
      %15 = vector.broadcast %14 : vector<1x512xf32> to vector<16x512xf32>
      %c0_12 = arith.constant 0 : index
      %c0_13 = arith.constant 0 : index
      %16 = vector.load %arg8[%c0_12, %c0_13] : memref<16x512xf32, #tpu.memory_space<vmem>>, vector<16x512xf32>
      tpu.vector_store %arg8[%c0_12, %c0_13], %15 {strides = array<i32>} : memref<16x512xf32, #tpu.memory_space<vmem>>, vector<16x512xf32>,
    } else {
    }
    %c0 = arith.constant 0 : index
    %c0_1 = arith.constant 0 : index
    %3 = vector.load %arg8[%c0, %c0_1] : memref<16x512xf32, #tpu.memory_space<vmem>>, vector<16x512xf32>
    %c0_2 = arith.constant 0 : index
    %c0_3 = arith.constant 0 : index
    %4 = vector.load %arg2[%c0_2, %c0_3] : memref<16x256xf32, #tpu.memory_space<vmem>>, vector<16x256xf32>
    %5 = arith.truncf %4 : vector<16x256xf32> to vector<16x256xbf16>
    %c0_4 = arith.constant 0 : index
    %c0_5 = arith.constant 0 : index
    %6 = vector.load %arg3[%c0_4, %c0_5] : memref<256x512xbf16, #tpu.memory_space<vmem>>, vector<256x512xbf16>
    %cst = arith.constant dense<0.000000e+00> : vector<16x512xf32>
    %7 = tpu.matmul %5, %6, %cst {dimension_numbers = #tpu.dot_dimension_numbers<[1], [0], [0], [1], [0, 0, 1, 1], [], []>} : vector<16x256xbf16>, vector<256x512xbf16>, vector<16x512xf32> -> vector<16x512xf32>
    %8 = arith.addf %3, %7 : vector<16x512xf32>
    %c0_6 = arith.constant 0 : index
    %c0_7 = arith.constant 0 : index
    %9 = vector.load %arg8[%c0_6, %c0_7] : memref<16x512xf32, #tpu.memory_space<vmem>>, vector<16x512xf32>
    tpu.vector_store %arg8[%c0_6, %c0_7], %8 {strides = array<i32>} : memref<16x512xf32, #tpu.memory_space<vmem>>, vector<16x512xf32>,
    %c0_i32_8 = arith.constant 0 : i32
    %10 = arith.cmpi eq, %arg1, %c0_i32_8 : i32
    %11 = arith.extui %10 : i1 to i32
    %c0_i32_9 = arith.constant 0 : i32
    %12 = arith.cmpi ne, %11, %c0_i32_9 : i32
    scf.if %12 {
      %c0_10 = arith.constant 0 : index
      %c0_11 = arith.constant 0 : index
      %13 = vector.load %arg8[%c0_10, %c0_11] : memref<16x512xf32, #tpu.memory_space<vmem>>, vector<16x512xf32>
      %cst_12 = arith.constant 0.000000e+00 : f32
      %14 = vector.broadcast %cst_12 : f32 to vector<16x512xf32>
      %15 = arith.maximumf %13, %14 : vector<16x512xf32>
      %16 = arith.truncf %15 : vector<16x512xf32> to vector<16x512xbf16>
      %c0_13 = arith.constant 0 : index
      %c0_14 = arith.constant 0 : index
      %17 = vector.load %arg5[%c0_13, %c0_14] : memref<512x128xbf16, #tpu.memory_space<vmem>>, vector<512x128xbf16>
      %cst_15 = arith.constant dense<0.000000e+00> : vector<16x128xf32>
      %18 = tpu.matmul %16, %17, %cst_15 {dimension_numbers = #tpu.dot_dimension_numbers<[1], [0], [0], [1], [0, 0, 1, 1], [], []>} : vector<16x512xbf16>, vector<512x128xbf16>, vector<16x128xf32> -> vector<16x128xf32>
      %c0_16 = arith.constant 0 : index
      %c0_17 = arith.constant 0 : index
      %19 = vector.load %arg6[%c0_16, %c0_17] : memref<1x128xf32, #tpu.memory_space<vmem>>, vector<1x128xf32>
      %20 = vector.broadcast %19 : vector<1x128xf32> to vector<16x128xf32>
      %21 = arith.addf %18, %20 : vector<16x128xf32>
      %c0_18 = arith.constant 0 : index
      %c0_19 = arith.constant 0 : index
      %22 = vector.load %arg7[%c0_18, %c0_19] : memref<16x128xf32, #tpu.memory_space<vmem>>, vector<16x128xf32>
      tpu.vector_store %arg7[%c0_18, %c0_19], %21 {strides = array<i32>} : memref<16x128xf32, #tpu.memory_space<vmem>>, vector<16x128xf32>,
    } else {
    }
    return
  }
  func.func @transform_0(%arg0: i32, %arg1: i32) -> (i32, i32) {
    %c0_i32 = arith.constant 0 : i32
    return %arg0, %arg1 : i32, i32
  }
  func.func @transform_1(%arg0: i32, %arg1: i32) -> (i32, i32) {
    %c0_i32 = arith.constant 0 : i32
    %c0_i32_0 = arith.constant 0 : i32
    %c0_i32_1 = arith.constant 0 : i32
    return %c0_i32, %c0_i32_0 : i32, i32
  }
  func.func @transform_2(%arg0: i32, %arg1: i32) -> (i32, i32) {
    %c0_i32 = arith.constant 0 : i32
    %c0_i32_0 = arith.constant 0 : i32
    %c0_i32_1 = arith.constant 0 : i32
    return %c0_i32, %c0_i32_0 : i32, i32
  }
  func.func @transform_3(%arg0: i32, %arg1: i32) -> (i32, i32) {
    %c0_i32 = arith.constant 0 : i32
    %c0_i32_0 = arith.constant 0 : i32
    %c0_i32_1 = arith.constant 0 : i32
    return %c0_i32, %c0_i32_0 : i32, i32
  }
  func.func @transform_4(%arg0: i32, %arg1: i32) -> (i32, i32) {
    %c0_i32 = arith.constant 0 : i32
    %c0_i32_0 = arith.constant 0 : i32
    %c0_i32_1 = arith.constant 0 : i32
    return %c0_i32, %c0_i32_0 : i32, i32
  }
  func.func @transform_5(%arg0: i32, %arg1: i32) -> (i32, i32) {
    %c0_i32 = arith.constant 0 : i32
    %c0_i32_0 = arith.constant 0 : i32
    return %arg0, %c0_i32 : i32, i32
  }
}

</mosaic_0001>

<llo_original>
// kernel: tpu_custom_call.1
$region0: #{tpu_custom_call.1}
  #allocation0 [shape = 'u32[]', space=smem, size = 0x4, offset = 0x4, fixed_abs, tag = 'smem constant byte address 0x4 - core index']
  #allocation1 [shape = 'u32[144,128]{1,0:T(1,128)}', space=vmem, size = 0x12000, scoped, tag = 'internal scratch']
  #allocation2 [shape = 'f32[16,512]{1,0:T(8,128)}', space=vmem, size = 0x8000, scoped, tag = 'scratch operand']
  %s0 = inlined_call_operand.hbm [shape: f32[16,256], index: 0, kind: input, shape index: {}]
  %s1 = inlined_call_operand.hbm [shape: bf16[256,512], index: 1, kind: input, shape index: {}]
  %s2 = inlined_call_operand.vmem [shape: f32[1,512], index: 2, kind: input, shape index: {}]
  %s3 = inlined_call_operand.hbm [shape: bf16[512,128], index: 3, kind: input, shape index: {}]
  %s4 = inlined_call_operand.vmem [shape: f32[1,128], index: 4, kind: input, shape index: {}]
  %s5 = inlined_call_operand.hbm [shape: f32[16,128], index: 5, kind: output, shape index: {}]
  %s6 = sld [smem:[#allocation0]]
  $region50: #{tpu_custom_call.1} parent=0
    _
  %s8 = ssub.s32 1, %s6
  %s9 = scalar_select 0, %s8, %s6
  $region1: #{tpu_custom_call.1} parent=0
    #allocation3 [shape = 'u8[16384]{0}', space=vmem, size = 0x4000, scoped, tag = 'input window, operand 0, single buffered']
    #allocation4 [shape = 's32[1]{0}', space=sflag, size = 0x4, scoped, tag = 'scoped memory for tpu_custom_call.1']
    #allocation5 [shape = 's32[1]{0}', space=sflag, size = 0x4, scoped, tag = 'scoped memory for tpu_custom_call.1']
    #allocation6 [shape = 'u8[262144]{0}', space=vmem, size = 0x40000, scoped, tag = 'input window, operand 1, single buffered']
    #allocation7 [shape = 's32[1]{0}', space=sflag, size = 0x4, scoped, tag = 'scoped memory for tpu_custom_call.1']
    #allocation8 [shape = 'u8[131072]{0}', space=vmem, size = 0x20000, scoped, tag = 'input window, operand 3, single buffered']
    #allocation9 [shape = 'u8[8192]{0}', space=vmem, size = 0x2000, scoped, tag = 'output window, operand 0, single buffered']
    %10 = vsyncpa [#allocation4], 0
    %11 = vsyncpa [#allocation7], 0
    %12 = vsyncpa [#allocation5], 0
    // Predicated region
    $region2: #{tpu_custom_call.1} parent=1 // pred_check
      _
    $region3: #{tpu_custom_call.1} parent=1 // pred_check_branch
      %14 = sbr.rel (0) target = $region5
    $region4: #{tpu_custom_call.1} parent=1 // pred_region
      %s16 = ssub.s32 512, 512
      %17 = vsyncadd [#allocation4], %s16
      %s18 = sshll.u32 [#allocation3], 4
      %s19 = int_to_ptr.vmem [resolvable:$true] %s18
      %24 = dma.hbm_to_vmem [thread:$0]  %s0, 512, %s19, [#allocation4], 256, 256, 16
    $region5: #{tpu_custom_call.1} parent=1 // pred_fallthru
      _
    // Predicated region
    $region6: #{tpu_custom_call.1} parent=1 // pred_check
      _
    $region7: #{tpu_custom_call.1} parent=1 // pred_check_branch
      %26 = sbr.rel (0) target = $region9
    $region8: #{tpu_custom_call.1} parent=1 // pred_region
      %s28 = ssub.s32 8192, 8192
      %29 = vsyncadd [#allocation7], %s28
      %s30 = sshll.u32 [#allocation6], 4
      %s31 = int_to_ptr.vmem [resolvable:$true] %s30
      %36 = dma.hbm_to_vmem [thread:$0]  %s1, 8192, %s31, [#allocation7], 256, 256, 16
    $region9: #{tpu_custom_call.1} parent=1 // pred_fallthru
      _
    // Predicated region
    $region10: #{tpu_custom_call.1} parent=1 // pred_check
      _
    $region11: #{tpu_custom_call.1} parent=1 // pred_check_branch
      %38 = sbr.rel (0) target = $region13
    $region12: #{tpu_custom_call.1} parent=1 // pred_region
      _
    $region13: #{tpu_custom_call.1} parent=1 // pred_fallthru
      _
    // Predicated region
    $region14: #{tpu_custom_call.1} parent=1 // pred_check
      _
    $region15: #{tpu_custom_call.1} parent=1 // pred_check_branch
      %40 = sbr.rel (0) target = $region17
    $region16: #{tpu_custom_call.1} parent=1 // pred_region
      %s42 = ssub.s32 4096, 4096
      %43 = vsyncadd [#allocation7], %s42
      %s44 = sshll.u32 [#allocation8], 4
      %s45 = int_to_ptr.vmem [resolvable:$true] %s44
      %50 = dma.hbm_to_vmem [thread:$0]  %s3, 4096, %s45, [#allocation7], 64, 64, 4
    $region17: #{tpu_custom_call.1} parent=1 // pred_fallthru
      _
    // Predicated region
    $region18: #{tpu_custom_call.1} parent=1 // pred_check
      _
    $region19: #{tpu_custom_call.1} parent=1 // pred_check_branch
      %52 = sbr.rel (0) target = $region21
    $region20: #{tpu_custom_call.1} parent=1 // pred_region
      _
    $region21: #{tpu_custom_call.1} parent=1 // pred_fallthru
      _
    // Predicated region
    $region22: #{tpu_custom_call.1} parent=1 // pred_check
      _
    $region23: #{tpu_custom_call.1} parent=1 // pred_check_branch
      %54 = sbr.rel (0) target = $region25
    $region24: #{tpu_custom_call.1} parent=1 // pred_region
      %55 = dma.done [#allocation4], 512
    $region25: #{tpu_custom_call.1} parent=1 // pred_fallthru
      _
    // Predicated region
    $region26: #{tpu_custom_call.1} parent=1 // pred_check
      _
    $region27: #{tpu_custom_call.1} parent=1 // pred_check_branch
      %57 = sbr.rel (0) target = $region29
    $region28: #{tpu_custom_call.1} parent=1 // pred_region
      %58 = dma.done [#allocation7], 8192
    $region29: #{tpu_custom_call.1} parent=1 // pred_fallthru
      _
    // Predicated region
    $region30: #{tpu_custom_call.1} parent=1 // pred_check
      _
    $region31: #{tpu_custom_call.1} parent=1 // pred_check_branch
      %60 = sbr.rel (0) target = $region33
    $region32: #{tpu_custom_call.1} parent=1 // pred_region
      %61 = dma.done [#allocation7], 4096
    $region33: #{tpu_custom_call.1} parent=1 // pred_fallthru
      _
    %p63 = scmp.eq.s32.totalorder 0, 0
    // Predicated region
    $region34: #{tpu_custom_call.1} parent=1 // pred_check
      %p64 = pneg %p63
    $region35: #{tpu_custom_call.1} parent=1 // pred_check_branch
      %66 = sbr.rel (%p64) target = $region37
    $region36: #{tpu_custom_call.1} parent=1 // pred_region
      %v67 = vld [vmem:[%s2] sm:$0xf]
      %v69 = vlaneseq
      %v70 = vshrl.u32 %v69, 7
      %v71 = vsub.s32 0, %v70
      %v72 = vrot.slane %v67, %v71
      %v73 = vlaneseq
      %v74 = vshrl.u32 %v73, 7
      %v75 = vsub.s32 1, %v74
      %v76 = vrot.slane %v67, %v75
      %v77 = vlaneseq
      %v78 = vshrl.u32 %v77, 7
      %v79 = vsub.s32 2, %v78
      %v80 = vrot.slane %v67, %v79
      %v81 = vlaneseq
      %v82 = vshrl.u32 %v81, 7
      %v83 = vsub.s32 3, %v82
      %v84 = vrot.slane %v67, %v83
      %89 = vst [vmem:[#allocation2] sm:$0xff] %v72
      %90 = vst [vmem:[#allocation2 + $0x8] sm:$0xff] %v76
      %91 = vst [vmem:[#allocation2 + $0x10] sm:$0xff] %v80
      %92 = vst [vmem:[#allocation2 + $0x18] sm:$0xff] %v84
      %93 = vst [vmem:[#allocation2 + $0x20] sm:$0xff] %v72
      %94 = vst [vmem:[#allocation2 + $0x28] sm:$0xff] %v76
      %95 = vst [vmem:[#allocation2 + $0x30] sm:$0xff] %v80
      %96 = vst [vmem:[#allocation2 + $0x38] sm:$0xff] %v84
    $region37: #{tpu_custom_call.1} parent=1 // pred_fallthru
      _
    %v97 = vld [vmem:[#allocation2] sm:$0xff]
    %v98 = vld [vmem:[#allocation2 + $0x8] sm:$0xff]
    %v99 = vld [vmem:[#allocation2 + $0x10] sm:$0xff]
    %v100 = vld [vmem:[#allocation2 + $0x18] sm:$0xff]
    %v101 = vld [vmem:[#allocation2 + $0x20] sm:$0xff]
    %v102 = vld [vmem:[#allocation2 + $0x28] sm:$0xff]
    %v103 = vld [vmem:[#allocation2 + $0x30] sm:$0xff]
    %v104 = vld [vmem:[#allocation2 + $0x38] sm:$0xff]
    %v105 = vld [vmem:[#allocation3] sm:$0xff]
    %v106 = vld [vmem:[#allocation3 + $0x8] sm:$0xff]
    %v107 = vld [vmem:[#allocation3 + $0x10] sm:$0xff]
    %v108 = vld [vmem:[#allocation3 + $0x18] sm:$0xff]
    %v109 = vpack.c.bf16 %v107, %v105
    %v110 = vpack.c.bf16 %v108, %v106
    %v111 = vld [vmem:[#allocation6] sm:$0xff]
    %v112 = vld [vmem:[#allocation6 + $0x8] sm:$0xff]
    %v113 = vld [vmem:[#allocation6 + $0x10] sm:$0xff]
    %v114 = vld [vmem:[#allocation6 + $0x18] sm:$0xff]
    %v115 = vld [vmem:[#allocation6 + $0x20] sm:$0xff]
    %v116 = vld [vmem:[#allocation6 + $0x28] sm:$0xff]
    %v117 = vld [vmem:[#allocation6 + $0x30] sm:$0xff]
    %v118 = vld [vmem:[#allocation6 + $0x38] sm:$0xff]
    %v119 = vld [vmem:[#allocation6 + $0x40] sm:$0xff]
    %v120 = vld [vmem:[#allocation6 + $0x48] sm:$0xff]
    %v121 = vld [vmem:[#allocation6 + $0x50] sm:$0xff]
    %v122 = vld [vmem:[#allocation6 + $0x58] sm:$0xff]
    %v123 = vld [vmem:[#allocation6 + $0x60] sm:$0xff]
    %v124 = vld [vmem:[#allocation6 + $0x68] sm:$0xff]
    %v125 = vld [vmem:[#allocation6 + $0x70] sm:$0xff]
    %v126 = vld [vmem:[#allocation6 + $0x78] sm:$0xff]
    %v127 = vld [vmem:[#allocation6 + $0x80] sm:$0xff]
    %v128 = vld [vmem:[#allocation6 + $0x88] sm:$0xff]
    %v129 = vld [vmem:[#allocation6 + $0x90] sm:$0xff]
    %v130 = vld [vmem:[#allocation6 + $0x98] sm:$0xff]
    %v131 = vld [vmem:[#allocation6 + $0xa0] sm:$0xff]
    %v132 = vld [vmem:[#allocation6 + $0xa8] sm:$0xff]
    %v133 = vld [vmem:[#allocation6 + $0xb0] sm:$0xff]
    %v134 = vld [vmem:[#allocation6 + $0xb8] sm:$0xff]
    %v135 = vld [vmem:[#allocation6 + $0xc0] sm:$0xff]
    %v136 = vld [vmem:[#allocation6 + $0xc8] sm:$0xff]
    %v137 = vld [vmem:[#allocation6 + $0xd0] sm:$0xff]
    %v138 = vld [vmem:[#allocation6 + $0xd8] sm:$0xff]
    %v139 = vld [vmem:[#allocation6 + $0xe0] sm:$0xff]
    %v140 = vld [vmem:[#allocation6 + $0xe8] sm:$0xff]
    %v141 = vld [vmem:[#allocation6 + $0xf0] sm:$0xff]
    %v142 = vld [vmem:[#allocation6 + $0xf8] sm:$0xff]
    %v143 = vld [vmem:[#allocation6 + $0x100] sm:$0xff]
    %v144 = vld [vmem:[#allocation6 + $0x108] sm:$0xff]
    %v145 = vld [vmem:[#allocation6 + $0x110] sm:$0xff]
    %v146 = vld [vmem:[#allocation6 + $0x118] sm:$0xff]
    %v147 = vld [vmem:[#allocation6 + $0x120] sm:$0xff]
    %v148 = vld [vmem:[#allocation6 + $0x128] sm:$0xff]
    %v149 = vld [vmem:[#allocation6 + $0x130] sm:$0xff]
    %v150 = vld [vmem:[#allocation6 + $0x138] sm:$0xff]
    %v151 = vld [vmem:[#allocation6 + $0x140] sm:$0xff]
    %v152 = vld [vmem:[#allocation6 + $0x148] sm:$0xff]
    %v153 = vld [vmem:[#allocation6 + $0x150] sm:$0xff]
    %v154 = vld [vmem:[#allocation6 + $0x158] sm:$0xff]
    %v155 = vld [vmem:[#allocation6 + $0x160] sm:$0xff]
    %v156 = vld [vmem:[#allocation6 + $0x168] sm:$0xff]
    %v157 = vld [vmem:[#allocation6 + $0x170] sm:$0xff]
    %v158 = vld [vmem:[#allocation6 + $0x178] sm:$0xff]
    %v159 = vld [vmem:[#allocation6 + $0x180] sm:$0xff]
    %v160 = vld [vmem:[#allocation6 + $0x188] sm:$0xff]
    %v161 = vld [vmem:[#allocation6 + $0x190] sm:$0xff]
    %v162 = vld [vmem:[#allocation6 + $0x198] sm:$0xff]
    %v163 = vld [vmem:[#allocation6 + $0x1a0] sm:$0xff]
    %v164 = vld [vmem:[#allocation6 + $0x1a8] sm:$0xff]
    %v165 = vld [vmem:[#allocation6 + $0x1b0] sm:$0xff]
    %v166 = vld [vmem:[#allocation6 + $0x1b8] sm:$0xff]
    %v167 = vld [vmem:[#allocation6 + $0x1c0] sm:$0xff]
    %v168 = vld [vmem:[#allocation6 + $0x1c8] sm:$0xff]
    %v169 = vld [vmem:[#allocation6 + $0x1d0] sm:$0xff]
    %v170 = vld [vmem:[#allocation6 + $0x1d8] sm:$0xff]
    %v171 = vld [vmem:[#allocation6 + $0x1e0] sm:$0xff]
    %v172 = vld [vmem:[#allocation6 + $0x1e8] sm:$0xff]
    %v173 = vld [vmem:[#allocation6 + $0x1f0] sm:$0xff]
    %v174 = vld [vmem:[#allocation6 + $0x1f8] sm:$0xff]
    %v239 = vunpack.c.l.b16 %v111
    %v240 = vunpack.c.h.b16 %v111
    %v241 = vunpack.c.l.b16 %v112
    %v242 = vunpack.c.h.b16 %v112
    %v243 = vunpack.c.l.b16 %v113
    %v244 = vunpack.c.h.b16 %v113
    %v245 = vunpack.c.l.b16 %v114
    %v246 = vunpack.c.h.b16 %v114
    %v247 = vunpack.c.l.b16 %v115
    %v248 = vunpack.c.h.b16 %v115
    %v249 = vunpack.c.l.b16 %v116
    %v250 = vunpack.c.h.b16 %v116
    %v251 = vunpack.c.l.b16 %v117
    %v252 = vunpack.c.h.b16 %v117
    %v253 = vunpack.c.l.b16 %v118
    %v254 = vunpack.c.h.b16 %v118
    %v255 = vunpack.c.l.b16 %v119
    %v256 = vunpack.c.h.b16 %v119
    %v257 = vunpack.c.l.b16 %v120
    %v258 = vunpack.c.h.b16 %v120
    %v259 = vunpack.c.l.b16 %v121
    %v260 = vunpack.c.h.b16 %v121
    %v261 = vunpack.c.l.b16 %v122
    %v262 = vunpack.c.h.b16 %v122
    %v263 = vunpack.c.l.b16 %v123
    %v264 = vunpack.c.h.b16 %v123
    %v265 = vunpack.c.l.b16 %v124
    %v266 = vunpack.c.h.b16 %v124
    %v267 = vunpack.c.l.b16 %v125
    %v268 = vunpack.c.h.b16 %v125
    %v269 = vunpack.c.l.b16 %v126
    %v270 = vunpack.c.h.b16 %v126
    %v271 = vunpack.c.l.b16 %v127
    %v272 = vunpack.c.h.b16 %v127
    %v273 = vunpack.c.l.b16 %v128
    %v274 = vunpack.c.h.b16 %v128
    %v275 = vunpack.c.l.b16 %v129
    %v276 = vunpack.c.h.b16 %v129
    %v277 = vunpack.c.l.b16 %v130
    %v278 = vunpack.c.h.b16 %v130
    %v279 = vunpack.c.l.b16 %v131
    %v280 = vunpack.c.h.b16 %v131
    %v281 = vunpack.c.l.b16 %v132
    %v282 = vunpack.c.h.b16 %v132
    %v283 = vunpack.c.l.b16 %v133
    %v284 = vunpack.c.h.b16 %v133
    %v285 = vunpack.c.l.b16 %v134
    %v286 = vunpack.c.h.b16 %v134
    %v287 = vunpack.c.l.b16 %v135
    %v288 = vunpack.c.h.b16 %v135
    %v289 = vunpack.c.l.b16 %v136
    %v290 = vunpack.c.h.b16 %v136
    %v291 = vunpack.c.l.b16 %v137
    %v292 = vunpack.c.h.b16 %v137
    %v293 = vunpack.c.l.b16 %v138
    %v294 = vunpack.c.h.b16 %v138
    %v295 = vunpack.c.l.b16 %v139
    %v296 = vunpack.c.h.b16 %v139
    %v297 = vunpack.c.l.b16 %v140
    %v298 = vunpack.c.h.b16 %v140
    %v299 = vunpack.c.l.b16 %v141
    %v300 = vunpack.c.h.b16 %v141
    %v301 = vunpack.c.l.b16 %v142
    %v302 = vunpack.c.h.b16 %v142
    %v303 = vunpack.c.l.b16 %v143
    %v304 = vunpack.c.h.b16 %v143
    %v305 = vunpack.c.l.b16 %v144
    %v306 = vunpack.c.h.b16 %v144
    %v307 = vunpack.c.l.b16 %v145
    %v308 = vunpack.c.h.b16 %v145
    %v309 = vunpack.c.l.b16 %v146
    %v310 = vunpack.c.h.b16 %v146
    %v311 = vunpack.c.l.b16 %v147
    %v312 = vunpack.c.h.b16 %v147
    %v313 = vunpack.c.l.b16 %v148
    %v314 = vunpack.c.h.b16 %v148
    %v315 = vunpack.c.l.b16 %v149
    %v316 = vunpack.c.h.b16 %v149
    %v317 = vunpack.c.l.b16 %v150
    %v318 = vunpack.c.h.b16 %v150
    %v319 = vunpack.c.l.b16 %v151
    %v320 = vunpack.c.h.b16 %v151
    %v321 = vunpack.c.l.b16 %v152
    %v322 = vunpack.c.h.b16 %v152
    %v323 = vunpack.c.l.b16 %v153
    %v324 = vunpack.c.h.b16 %v153
    %v325 = vunpack.c.l.b16 %v154
    %v326 = vunpack.c.h.b16 %v154
    %v327 = vunpack.c.l.b16 %v155
    %v328 = vunpack.c.h.b16 %v155
    %v329 = vunpack.c.l.b16 %v156
    %v330 = vunpack.c.h.b16 %v156
    %v331 = vunpack.c.l.b16 %v157
    %v332 = vunpack.c.h.b16 %v157
    %v333 = vunpack.c.l.b16 %v158
    %v334 = vunpack.c.h.b16 %v158
    %v335 = vunpack.c.l.b16 %v159
    %v336 = vunpack.c.h.b16 %v159
    %v337 = vunpack.c.l.b16 %v160
    %v338 = vunpack.c.h.b16 %v160
    %v339 = vunpack.c.l.b16 %v161
    %v340 = vunpack.c.h.b16 %v161
    %v341 = vunpack.c.l.b16 %v162
    %v342 = vunpack.c.h.b16 %v162
    %v343 = vunpack.c.l.b16 %v163
    %v344 = vunpack.c.h.b16 %v163
    %v345 = vunpack.c.l.b16 %v164
    %v346 = vunpack.c.h.b16 %v164
    %v347 = vunpack.c.l.b16 %v165
    %v348 = vunpack.c.h.b16 %v165
    %v349 = vunpack.c.l.b16 %v166
    %v350 = vunpack.c.h.b16 %v166
    %v351 = vunpack.c.l.b16 %v167
    %v352 = vunpack.c.h.b16 %v167
    %v353 = vunpack.c.l.b16 %v168
    %v354 = vunpack.c.h.b16 %v168
    %v355 = vunpack.c.l.b16 %v169
    %v356 = vunpack.c.h.b16 %v169
    %v357 = vunpack.c.l.b16 %v170
    %v358 = vunpack.c.h.b16 %v170
    %v359 = vunpack.c.l.b16 %v171
    %v360 = vunpack.c.h.b16 %v171
    %v361 = vunpack.c.l.b16 %v172
    %v362 = vunpack.c.h.b16 %v172
    %v363 = vunpack.c.l.b16 %v173
    %v364 = vunpack.c.h.b16 %v173
    %v365 = vunpack.c.l.b16 %v174
    %v366 = vunpack.c.h.b16 %v174
    %v367 = vpack.c.b16 %v243, %v239
    %v368 = vpack.c.b16 %v244, %v240
    %v369 = vpack.c.b16 %v245, %v241
    %v370 = vpack.c.b16 %v246, %v242
    %v371 = vpack.c.b16 %v251, %v247
    %v372 = vpack.c.b16 %v252, %v248
    %v373 = vpack.c.b16 %v253, %v249
    %v374 = vpack.c.b16 %v254, %v250
    %v375 = vpack.c.b16 %v259, %v255
    %v376 = vpack.c.b16 %v260, %v256
    %v377 = vpack.c.b16 %v261, %v257
    %v378 = vpack.c.b16 %v262, %v258
    %v379 = vpack.c.b16 %v267, %v263
    %v380 = vpack.c.b16 %v268, %v264
    %v381 = vpack.c.b16 %v269, %v265
    %v382 = vpack.c.b16 %v270, %v266
    %v383 = vpack.c.b16 %v275, %v271
    %v384 = vpack.c.b16 %v276, %v272
    %v385 = vpack.c.b16 %v277, %v273
    %v386 = vpack.c.b16 %v278, %v274
    %v387 = vpack.c.b16 %v283, %v279
    %v388 = vpack.c.b16 %v284, %v280
    %v389 = vpack.c.b16 %v285, %v281
    %v390 = vpack.c.b16 %v286, %v282
    %v391 = vpack.c.b16 %v291, %v287
    %v392 = vpack.c.b16 %v292, %v288
    %v393 = vpack.c.b16 %v293, %v289
    %v394 = vpack.c.b16 %v294, %v290
    %v395 = vpack.c.b16 %v299, %v295
    %v396 = vpack.c.b16 %v300, %v296
    %v397 = vpack.c.b16 %v301, %v297
    %v398 = vpack.c.b16 %v302, %v298
    %v399 = vpack.c.b16 %v307, %v303
    %v400 = vpack.c.b16 %v308, %v304
    %v401 = vpack.c.b16 %v309, %v305
    %v402 = vpack.c.b16 %v310, %v306
    %v403 = vpack.c.b16 %v315, %v311
    %v404 = vpack.c.b16 %v316, %v312
    %v405 = vpack.c.b16 %v317, %v313
    %v406 = vpack.c.b16 %v318, %v314
    %v407 = vpack.c.b16 %v323, %v319
    %v408 = vpack.c.b16 %v324, %v320
    %v409 = vpack.c.b16 %v325, %v321
    %v410 = vpack.c.b16 %v326, %v322
    %v411 = vpack.c.b16 %v331, %v327
    %v412 = vpack.c.b16 %v332, %v328
    %v413 = vpack.c.b16 %v333, %v329
    %v414 = vpack.c.b16 %v334, %v330
    %v415 = vpack.c.b16 %v339, %v335
    %v416 = vpack.c.b16 %v340, %v336
    %v417 = vpack.c.b16 %v341, %v337
    %v418 = vpack.c.b16 %v342, %v338
    %v419 = vpack.c.b16 %v347, %v343
    %v420 = vpack.c.b16 %v348, %v344
    %v421 = vpack.c.b16 %v349, %v345
    %v422 = vpack.c.b16 %v350, %v346
    %v423 = vpack.c.b16 %v355, %v351
    %v424 = vpack.c.b16 %v356, %v352
    %v425 = vpack.c.b16 %v357, %v353
    %v426 = vpack.c.b16 %v358, %v354
    %v427 = vpack.c.b16 %v363, %v359
    %v428 = vpack.c.b16 %v364, %v360
    %v429 = vpack.c.b16 %v365, %v361
    %v430 = vpack.c.b16 %v366, %v362
    %495 = vmatprep.subr.bf16.mxu0 %v368
    %496 = vmatpush1.bf16.msra.mxu0 %v367
    %497 = vmatprep.subr.bf16.mxu0 %v372
    %498 = vmatpush1.bf16.msra.mxu0 %v371
    %499 = vmatprep.subr.bf16.mxu0 %v376
    %500 = vmatpush1.bf16.msra.mxu0 %v375
    %501 = vmatprep.subr.bf16.mxu0 %v380
    %502 = vmatpush1.bf16.msra.mxu0 %v379
    %503 = vmatprep.subr.bf16.mxu0 %v384
    %504 = vmatpush1.bf16.msra.mxu0 %v383
    %505 = vmatprep.subr.bf16.mxu0 %v388
    %506 = vmatpush1.bf16.msra.mxu0 %v387
    %507 = vmatprep.subr.bf16.mxu0 %v392
    %508 = vmatpush1.bf16.msra.mxu0 %v391
    %509 = vmatprep.subr.bf16.mxu0 %v396
    %510 = vmatpush1.bf16.msra.mxu0 %v395
    %511 = vmatprep.subr.bf16.mxu0 %v400
    %512 = vmatpush1.bf16.msra.mxu0 %v399
    %513 = vmatprep.subr.bf16.mxu0 %v404
    %514 = vmatpush1.bf16.msra.mxu0 %v403
    %515 = vmatprep.subr.bf16.mxu0 %v408
    %516 = vmatpush1.bf16.msra.mxu0 %v407
    %517 = vmatprep.subr.bf16.mxu0 %v412
    %518 = vmatpush1.bf16.msra.mxu0 %v411
    %519 = vmatprep.subr.bf16.mxu0 %v416
    %520 = vmatpush1.bf16.msra.mxu0 %v415
    %521 = vmatprep.subr.bf16.mxu0 %v420
    %522 = vmatpush1.bf16.msra.mxu0 %v419
    %523 = vmatprep.subr.bf16.mxu0 %v424
    %524 = vmatpush1.bf16.msra.mxu0 %v423
    %525 = vmatprep.subr.bf16.mxu0 %v428
    %526 = vmatpush1.bf16.msra.mxu0 %v427
    %527 = vmatprep.mubr.bf16.mxu0 %v110
    %528 = vmatmul.mubr.bf16.gmra.mrb[0].mxu0 %v109
    %v529 = vpop.f32.mrb[0].mxu0
    %v530 = vadd.f32 0.0, %v529
    %v531 = vpop.f32.mrb[0].mxu0
    %v532 = vadd.f32 0.0, %v531
    %v533 = vpop.f32.mrb[0].mxu0
    %v534 = vadd.f32 0.0, %v533
    %v535 = vpop.f32.mrb[0].mxu0
    %v536 = vadd.f32 0.0, %v535
    %537 = vdwg.mxu0
    %538 = vmatprep.subr.bf16.mxu0 %v370
    %539 = vmatpush1.bf16.msra.mxu0 %v369
    %540 = vmatprep.subr.bf16.mxu0 %v374
    %541 = vmatpush1.bf16.msra.mxu0 %v373
    %542 = vmatprep.subr.bf16.mxu0 %v378
    %543 = vmatpush1.bf16.msra.mxu0 %v377
    %544 = vmatprep.subr.bf16.mxu0 %v382
    %545 = vmatpush1.bf16.msra.mxu0 %v381
    %546 = vmatprep.subr.bf16.mxu0 %v386
    %547 = vmatpush1.bf16.msra.mxu0 %v385
    %548 = vmatprep.subr.bf16.mxu0 %v390
    %549 = vmatpush1.bf16.msra.mxu0 %v389
    %550 = vmatprep.subr.bf16.mxu0 %v394
    %551 = vmatpush1.bf16.msra.mxu0 %v393
    %552 = vmatprep.subr.bf16.mxu0 %v398
    %553 = vmatpush1.bf16.msra.mxu0 %v397
    %554 = vmatprep.subr.bf16.mxu0 %v402
    %555 = vmatpush1.bf16.msra.mxu0 %v401
    %556 = vmatprep.subr.bf16.mxu0 %v406
    %557 = vmatpush1.bf16.msra.mxu0 %v405
    %558 = vmatprep.subr.bf16.mxu0 %v410
    %559 = vmatpush1.bf16.msra.mxu0 %v409
    %560 = vmatprep.subr.bf16.mxu0 %v414
    %561 = vmatpush1.bf16.msra.mxu0 %v413
    %562 = vmatprep.subr.bf16.mxu0 %v418
    %563 = vmatpush1.bf16.msra.mxu0 %v417
    %564 = vmatprep.subr.bf16.mxu0 %v422
    %565 = vmatpush1.bf16.msra.mxu0 %v421
    %566 = vmatprep.subr.bf16.mxu0 %v426
    %567 = vmatpush1.bf16.msra.mxu0 %v425
    %568 = vmatprep.subr.bf16.mxu0 %v430
    %569 = vmatpush1.bf16.msra.mxu0 %v429
    %570 = vmatprep.mubr.bf16.mxu0 %v110
    %571 = vmatmul.mubr.bf16.gmra.mrb[0].mxu0 %v109
    %v572 = vpop.f32.mrb[0].mxu0
    %v573 = vadd.f32 0.0, %v572
    %v574 = vpop.f32.mrb[0].mxu0
    %v575 = vadd.f32 0.0, %v574
    %v576 = vpop.f32.mrb[0].mxu0
    %v577 = vadd.f32 0.0, %v576
    %v578 = vpop.f32.mrb[0].mxu0
    %v579 = vadd.f32 0.0, %v578
    %580 = vdwg.mxu0
    %v581 = vadd.f32 %v97, %v530
    %v582 = vadd.f32 %v98, %v532
    %v583 = vadd.f32 %v99, %v573
    %v584 = vadd.f32 %v100, %v575
    %v585 = vadd.f32 %v101, %v534
    %v586 = vadd.f32 %v102, %v536
    %v587 = vadd.f32 %v103, %v577
    %v588 = vadd.f32 %v104, %v579
    %589 = vst [vmem:[#allocation2] sm:$0xff] %v581
    %590 = vst [vmem:[#allocation2 + $0x8] sm:$0xff] %v582
    %591 = vst [vmem:[#allocation2 + $0x10] sm:$0xff] %v583
    %592 = vst [vmem:[#allocation2 + $0x18] sm:$0xff] %v584
    %593 = vst [vmem:[#allocation2 + $0x20] sm:$0xff] %v585
    %594 = vst [vmem:[#allocation2 + $0x28] sm:$0xff] %v586
    %595 = vst [vmem:[#allocation2 + $0x30] sm:$0xff] %v587
    %596 = vst [vmem:[#allocation2 + $0x38] sm:$0xff] %v588
    // Predicated region
    $region38: #{tpu_custom_call.1} parent=1 // pred_check
      %p597 = pneg %p63
    $region39: #{tpu_custom_call.1} parent=1 // pred_check_branch
      %599 = sbr.rel (%p597) target = $region41
    $region40: #{tpu_custom_call.1} parent=1 // pred_region
      %v600 = vld [vmem:[#allocation2] sm:$0xff]
      %v601 = vld [vmem:[#allocation2 + $0x8] sm:$0xff]
      %v602 = vld [vmem:[#allocation2 + $0x10] sm:$0xff]
      %v603 = vld [vmem:[#allocation2 + $0x18] sm:$0xff]
      %v604 = vld [vmem:[#allocation2 + $0x20] sm:$0xff]
      %v605 = vld [vmem:[#allocation2 + $0x28] sm:$0xff]
      %v606 = vld [vmem:[#allocation2 + $0x30] sm:$0xff]
      %v607 = vld [vmem:[#allocation2 + $0x38] sm:$0xff]
      %v608 = vmax.f32 %v600, 0.0
      %v609 = vmax.f32 %v601, 0.0
      %v610 = vmax.f32 %v602, 0.0
      %v611 = vmax.f32 %v603, 0.0
      %v612 = vmax.f32 %v604, 0.0
      %v613 = vmax.f32 %v605, 0.0
      %v614 = vmax.f32 %v606, 0.0
      %v615 = vmax.f32 %v607, 0.0
      %v616 = vpack.c.bf16 %v612, %v608
      %v617 = vpack.c.bf16 %v613, %v609
      %v618 = vpack.c.bf16 %v614, %v610
      %v619 = vpack.c.bf16 %v615, %v611
      %v620 = vld [vmem:[#allocation8] sm:$0xf]
      %v621 = vld [vmem:[#allocation8 + $0x4] sm:$0xf]
      %v622 = vld [vmem:[#allocation8 + $0x8] sm:$0xf]
      %v623 = vld [vmem:[#allocation8 + $0xc] sm:$0xf]
      %v624 = vld [vmem:[#allocation8 + $0x10] sm:$0xf]
      %v625 = vld [vmem:[#allocation8 + $0x14] sm:$0xf]
      %v626 = vld [vmem:[#allocation8 + $0x18] sm:$0xf]
      %v627 = vld [vmem:[#allocation8 + $0x1c] sm:$0xf]
      %v628 = vld [vmem:[#allocation8 + $0x20] sm:$0xf]
      %v629 = vld [vmem:[#allocation8 + $0x24] sm:$0xf]
      %v630 = vld [vmem:[#allocation8 + $0x28] sm:$0xf]
      %v631 = vld [vmem:[#allocation8 + $0x2c] sm:$0xf]
      %v632 = vld [vmem:[#allocation8 + $0x30] sm:$0xf]
      %v633 = vld [vmem:[#allocation8 + $0x34] sm:$0xf]
      %v634 = vld [vmem:[#allocation8 + $0x38] sm:$0xf]
      %v635 = vld [vmem:[#allocation8 + $0x3c] sm:$0xf]
      %v636 = vld [vmem:[#allocation8 + $0x40] sm:$0xf]
      %v637 = vld [vmem:[#allocation8 + $0x44] sm:$0xf]
      %v638 = vld [vmem:[#allocation8 + $0x48] sm:$0xf]
      %v639 = vld [vmem:[#allocation8 + $0x4c] sm:$0xf]
      %v640 = vld [vmem:[#allocation8 + $0x50] sm:$0xf]
      %v641 = vld [vmem:[#allocation8 + $0x54] sm:$0xf]
      %v642 = vld [vmem:[#allocation8 + $0x58] sm:$0xf]
      %v643 = vld [vmem:[#allocation8 + $0x5c] sm:$0xf]
      %v644 = vld [vmem:[#allocation8 + $0x60] sm:$0xf]
      %v645 = vld [vmem:[#allocation8 + $0x64] sm:$0xf]
      %v646 = vld [vmem:[#allocation8 + $0x68] sm:$0xf]
      %v647 = vld [vmem:[#allocation8 + $0x6c] sm:$0xf]
      %v648 = vld [vmem:[#allocation8 + $0x70] sm:$0xf]
      %v649 = vld [vmem:[#allocation8 + $0x74] sm:$0xf]
      %v650 = vld [vmem:[#allocation8 + $0x78] sm:$0xf]
      %v651 = vld [vmem:[#allocation8 + $0x7c] sm:$0xf]
      %v652 = vld [vmem:[#allocation8 + $0x80] sm:$0xf]
      %v653 = vld [vmem:[#allocation8 + $0x84] sm:$0xf]
      %v654 = vld [vmem:[#allocation8 + $0x88] sm:$0xf]
      %v655 = vld [vmem:[#allocation8 + $0x8c] sm:$0xf]
      %v656 = vld [vmem:[#allocation8 + $0x90] sm:$0xf]
      %v657 = vld [vmem:[#allocation8 + $0x94] sm:$0xf]
      %v658 = vld [vmem:[#allocation8 + $0x98] sm:$0xf]
      %v659 = vld [vmem:[#allocation8 + $0x9c] sm:$0xf]
      %v660 = vld [vmem:[#allocation8 + $0xa0] sm:$0xf]
      %v661 = vld [vmem:[#allocation8 + $0xa4] sm:$0xf]
      %v662 = vld [vmem:[#allocation8 + $0xa8] sm:$0xf]
      %v663 = vld [vmem:[#allocation8 + $0xac] sm:$0xf]
      %v664 = vld [vmem:[#allocation8 + $0xb0] sm:$0xf]
      %v665 = vld [vmem:[#allocation8 + $0xb4] sm:$0xf]
      %v666 = vld [vmem:[#allocation8 + $0xb8] sm:$0xf]
      %v667 = vld [vmem:[#allocation8 + $0xbc] sm:$0xf]
      %v668 = vld [vmem:[#allocation8 + $0xc0] sm:$0xf]
      %v669 = vld [vmem:[#allocation8 + $0xc4] sm:$0xf]
      %v670 = vld [vmem:[#allocation8 + $0xc8] sm:$0xf]
      %v671 = vld [vmem:[#allocation8 + $0xcc] sm:$0xf]
      %v672 = vld [vmem:[#allocation8 + $0xd0] sm:$0xf]
      %v673 = vld [vmem:[#allocation8 + $0xd4] sm:$0xf]
      %v674 = vld [vmem:[#allocation8 + $0xd8] sm:$0xf]
      %v675 = vld [vmem:[#allocation8 + $0xdc] sm:$0xf]
      %v676 = vld [vmem:[#allocation8 + $0xe0] sm:$0xf]
      %v677 = vld [vmem:[#allocation8 + $0xe4] sm:$0xf]
      %v678 = vld [vmem:[#allocation8 + $0xe8] sm:$0xf]
      %v679 = vld [vmem:[#allocation8 + $0xec] sm:$0xf]
      %v680 = vld [vmem:[#allocation8 + $0xf0] sm:$0xf]
      %v681 = vld [vmem:[#allocation8 + $0xf4] sm:$0xf]
      %v682 = vld [vmem:[#allocation8 + $0xf8] sm:$0xf]
      %v683 = vld [vmem:[#allocation8 + $0xfc] sm:$0xf]
      %v684 = vld [vmem:[%s4] sm:$0x1]
      %v686 = vlaneseq
      %v687 = vshrl.u32 %v686, 7
      %v688 = vsub.s32 0, %v687
      %v689 = vrot.slane %v684, %v688
      %v755 = vunpack.c.l.b16 %v620
      %v756 = vunpack.c.l.b16 %v621
      %v757 = vunpack.c.l.b16 %v622
      %v758 = vunpack.c.l.b16 %v623
      %v759 = vunpack.c.l.b16 %v624
      %v760 = vunpack.c.l.b16 %v625
      %v761 = vunpack.c.l.b16 %v626
      %v762 = vunpack.c.l.b16 %v627
      %v763 = vunpack.c.l.b16 %v628
      %v764 = vunpack.c.l.b16 %v629
      %v765 = vunpack.c.l.b16 %v630
      %v766 = vunpack.c.l.b16 %v631
      %v767 = vunpack.c.l.b16 %v632
      %v768 = vunpack.c.l.b16 %v633
      %v769 = vunpack.c.l.b16 %v634
      %v770 = vunpack.c.l.b16 %v635
      %v771 = vunpack.c.l.b16 %v636
      %v772 = vunpack.c.l.b16 %v637
      %v773 = vunpack.c.l.b16 %v638
      %v774 = vunpack.c.l.b16 %v639
      %v775 = vunpack.c.l.b16 %v640
      %v776 = vunpack.c.l.b16 %v641
      %v777 = vunpack.c.l.b16 %v642
      %v778 = vunpack.c.l.b16 %v643
      %v779 = vunpack.c.l.b16 %v644
      %v780 = vunpack.c.l.b16 %v645
      %v781 = vunpack.c.l.b16 %v646
      %v782 = vunpack.c.l.b16 %v647
      %v783 = vunpack.c.l.b16 %v648
      %v784 = vunpack.c.l.b16 %v649
      %v785 = vunpack.c.l.b16 %v650
      %v786 = vunpack.c.l.b16 %v651
      %v787 = vunpack.c.l.b16 %v652
      %v788 = vunpack.c.l.b16 %v653
      %v789 = vunpack.c.l.b16 %v654
      %v790 = vunpack.c.l.b16 %v655
      %v791 = vunpack.c.l.b16 %v656
      %v792 = vunpack.c.l.b16 %v657
      %v793 = vunpack.c.l.b16 %v658
      %v794 = vunpack.c.l.b16 %v659
      %v795 = vunpack.c.l.b16 %v660
      %v796 = vunpack.c.l.b16 %v661
      %v797 = vunpack.c.l.b16 %v662
      %v798 = vunpack.c.l.b16 %v663
      %v799 = vunpack.c.l.b16 %v664
      %v800 = vunpack.c.l.b16 %v665
      %v801 = vunpack.c.l.b16 %v666
      %v802 = vunpack.c.l.b16 %v667
      %v803 = vunpack.c.l.b16 %v668
      %v804 = vunpack.c.l.b16 %v669
      %v805 = vunpack.c.l.b16 %v670
      %v806 = vunpack.c.l.b16 %v671
      %v807 = vunpack.c.l.b16 %v672
      %v808 = vunpack.c.l.b16 %v673
      %v809 = vunpack.c.l.b16 %v674
      %v810 = vunpack.c.l.b16 %v675
      %v811 = vunpack.c.l.b16 %v676
      %v812 = vunpack.c.l.b16 %v677
      %v813 = vunpack.c.l.b16 %v678
      %v814 = vunpack.c.l.b16 %v679
      %v815 = vunpack.c.l.b16 %v680
      %v816 = vunpack.c.l.b16 %v681
      %v817 = vunpack.c.l.b16 %v682
      %v818 = vunpack.c.l.b16 %v683
      %v819 = vpack.c.b16 %v756, %v755
      %v820 = vpack.c.b16 %v758, %v757
      %v821 = vpack.c.b16 %v760, %v759
      %v822 = vpack.c.b16 %v762, %v761
      %v823 = vpack.c.b16 %v764, %v763
      %v824 = vpack.c.b16 %v766, %v765
      %v825 = vpack.c.b16 %v768, %v767
      %v826 = vpack.c.b16 %v770, %v769
      %v827 = vpack.c.b16 %v772, %v771
      %v828 = vpack.c.b16 %v774, %v773
      %v829 = vpack.c.b16 %v776, %v775
      %v830 = vpack.c.b16 %v778, %v777
      %v831 = vpack.c.b16 %v780, %v779
      %v832 = vpack.c.b16 %v782, %v781
      %v833 = vpack.c.b16 %v784, %v783
      %v834 = vpack.c.b16 %v786, %v785
      %v835 = vpack.c.b16 %v788, %v787
      %v836 = vpack.c.b16 %v790, %v789
      %v837 = vpack.c.b16 %v792, %v791
      %v838 = vpack.c.b16 %v794, %v793
      %v839 = vpack.c.b16 %v796, %v795
      %v840 = vpack.c.b16 %v798, %v797
      %v841 = vpack.c.b16 %v800, %v799
      %v842 = vpack.c.b16 %v802, %v801
      %v843 = vpack.c.b16 %v804, %v803
      %v844 = vpack.c.b16 %v806, %v805
      %v845 = vpack.c.b16 %v808, %v807
      %v846 = vpack.c.b16 %v810, %v809
      %v847 = vpack.c.b16 %v812, %v811
      %v848 = vpack.c.b16 %v814, %v813
      %v849 = vpack.c.b16 %v816, %v815
      %v850 = vpack.c.b16 %v818, %v817
      %883 = vmatprep.subr.bf16.mxu0 0
      %884 = vmatpush1.bf16.msra.mxu0 %v819
      %885 = vmatprep.subr.bf16.mxu0 0
      %886 = vmatpush1.bf16.msra.mxu0 %v820
      %887 = vmatprep.subr.bf16.mxu0 0
      %888 = vmatpush1.bf16.msra.mxu0 %v821
      %889 = vmatprep.subr.bf16.mxu0 0
      %890 = vmatpush1.bf16.msra.mxu0 %v822
      %891 = vmatprep.subr.bf16.mxu0 0
      %892 = vmatpush1.bf16.msra.mxu0 %v823
      %893 = vmatprep.subr.bf16.mxu0 0
      %894 = vmatpush1.bf16.msra.mxu0 %v824
      %895 = vmatprep.subr.bf16.mxu0 0
      %896 = vmatpush1.bf16.msra.mxu0 %v825
      %897 = vmatprep.subr.bf16.mxu0 0
      %898 = vmatpush1.bf16.msra.mxu0 %v826
      %899 = vmatprep.subr.bf16.mxu0 0
      %900 = vmatpush1.bf16.msra.mxu0 %v827
      %901 = vmatprep.subr.bf16.mxu0 0
      %902 = vmatpush1.bf16.msra.mxu0 %v828
      %903 = vmatprep.subr.bf16.mxu0 0
      %904 = vmatpush1.bf16.msra.mxu0 %v829
      %905 = vmatprep.subr.bf16.mxu0 0
      %906 = vmatpush1.bf16.msra.mxu0 %v830
      %907 = vmatprep.subr.bf16.mxu0 0
      %908 = vmatpush1.bf16.msra.mxu0 %v831
      %909 = vmatprep.subr.bf16.mxu0 0
      %910 = vmatpush1.bf16.msra.mxu0 %v832
      %911 = vmatprep.subr.bf16.mxu0 0
      %912 = vmatpush1.bf16.msra.mxu0 %v833
      %913 = vmatprep.subr.bf16.mxu0 0
      %914 = vmatpush1.bf16.msra.mxu0 %v834
      %915 = vmatprep.mubr.bf16.mxu0 %v617
      %916 = vmatmul.mubr.bf16.gmra.mrb[0].mxu0 %v616
      %v917 = vpop.f32.mrb[0].mxu0
      %v918 = vadd.f32 %v689, %v917
      %v919 = vpop.f32.mrb[0].mxu0
      %v920 = vpop.f32.mrb[0].mxu0
      %v921 = vadd.f32 %v689, %v920
      %v922 = vpop.f32.mrb[0].mxu0
      %923 = vdwg.mxu0
      %924 = vmatprep.subr.bf16.mxu0 0
      %925 = vmatpush1.bf16.msra.mxu0 %v835
      %926 = vmatprep.subr.bf16.mxu0 0
      %927 = vmatpush1.bf16.msra.mxu0 %v836
      %928 = vmatprep.subr.bf16.mxu0 0
      %929 = vmatpush1.bf16.msra.mxu0 %v837
      %930 = vmatprep.subr.bf16.mxu0 0
      %931 = vmatpush1.bf16.msra.mxu0 %v838
      %932 = vmatprep.subr.bf16.mxu0 0
      %933 = vmatpush1.bf16.msra.mxu0 %v839
      %934 = vmatprep.subr.bf16.mxu0 0
      %935 = vmatpush1.bf16.msra.mxu0 %v840
      %936 = vmatprep.subr.bf16.mxu0 0
      %937 = vmatpush1.bf16.msra.mxu0 %v841
      %938 = vmatprep.subr.bf16.mxu0 0
      %939 = vmatpush1.bf16.msra.mxu0 %v842
      %940 = vmatprep.subr.bf16.mxu0 0
      %941 = vmatpush1.bf16.msra.mxu0 %v843
      %942 = vmatprep.subr.bf16.mxu0 0
      %943 = vmatpush1.bf16.msra.mxu0 %v844
      %944 = vmatprep.subr.bf16.mxu0 0
      %945 = vmatpush1.bf16.msra.mxu0 %v845
      %946 = vmatprep.subr.bf16.mxu0 0
      %947 = vmatpush1.bf16.msra.mxu0 %v846
      %948 = vmatprep.subr.bf16.mxu0 0
      %949 = vmatpush1.bf16.msra.mxu0 %v847
      %950 = vmatprep.subr.bf16.mxu0 0
      %951 = vmatpush1.bf16.msra.mxu0 %v848
      %952 = vmatprep.subr.bf16.mxu0 0
      %953 = vmatpush1.bf16.msra.mxu0 %v849
      %954 = vmatprep.subr.bf16.mxu0 0
      %955 = vmatpush1.bf16.msra.mxu0 %v850
      %956 = vmatprep.mubr.bf16.mxu0 %v619
      %957 = vmatmul.mubr.bf16.gmra.mrb[0].mxu0 %v618
      %v958 = vpop.f32.mrb[0].mxu0
      %v959 = vadd.f32 %v918, %v958
      %v960 = vpop.f32.mrb[0].mxu0
      %v961 = vpop.f32.mrb[0].mxu0
      %v962 = vadd.f32 %v921, %v961
      %v963 = vpop.f32.mrb[0].mxu0
      %964 = vdwg.mxu0
      %965 = vst [vmem:[#allocation9] sm:$0xff] %v959
      %966 = vst [vmem:[#allocation9 + $0x8] sm:$0xff] %v962
    $region41: #{tpu_custom_call.1} parent=1 // pred_fallthru
      _
    // Predicated region
    $region42: #{tpu_custom_call.1} parent=1 // pred_check
      _
    $region43: #{tpu_custom_call.1} parent=1 // pred_check_branch
      %968 = sbr.rel (0) target = $region45
    $region44: #{tpu_custom_call.1} parent=1 // pred_region
      %s970 = ssub.s32 256, 256
      %971 = vsyncadd [#allocation5], %s970
      %s972 = sshll.u32 [#allocation9], 4
      %s973 = int_to_ptr.vmem [resolvable:$true] %s972
      %978 = dma.vmem_to_hbm [thread:$0]  %s973, 256, %s5, [#allocation5], 128, 128, 8
    $region45: #{tpu_custom_call.1} parent=1 // pred_fallthru
      _
    // Predicated region
    $region46: #{tpu_custom_call.1} parent=1 // pred_check
      _
    $region47: #{tpu_custom_call.1} parent=1 // pred_check_branch
      %980 = sbr.rel (0) target = $region49
    $region48: #{tpu_custom_call.1} parent=1 // pred_region
      %981 = dma.done [#allocation5], 256
    $region49: #{tpu_custom_call.1} parent=1 // pred_fallthru
      _
    %982 = vsyncpa [#allocation4], 1
    %983 = vsyncpa [#allocation7], 1
    %984 = vsyncpa [#allocation5], 1

</llo_original>
